<compile_context>
chip_gen: v5e
topology: v5e:2x2
jax: 0.10.0
libtpu: 0.0.40
codegen_flags: <defaults>
</compile_context>

<pallas_src>
import math
from functools import partial

import jax
import jax.numpy as jnp
from jax import lax
from jax.experimental import pallas as pl
from jax.experimental.pallas import tpu as pltpu


def _conv_bn_relu_kernel(x_ref, w_ref, b_ref, o_ref, *, img_w, ksize):
    """One batch block (NB images) per grid step.

    x_ref : (NB, Cin, H*W)      flattened input images (f32), H*W on lanes
    w_ref : (Cout, K*K*Cin)     im2col weight matrix, BN scale folded in (bf16)
    b_ref : (Cout, 1)           folded BN bias + conv bias (f32)
    o_ref : (NB, Cout, H*W)     flattened outputs; only positions with
                                y < H-K+1 and x < W-K+1 are valid — the rest is
                                roll wrap-around garbage cropped by the wrapper.
    """
    nb, _, hw = x_ref.shape
    cout = o_ref.shape[1]

    w = w_ref[...]                                         # (Cout, K*K*Cin) bf16
    bias = jnp.broadcast_to(b_ref[...], (cout, hw))        # hoisted broadcast

    for bi in range(nb):                                   # nb is small & static
        xc = x_ref[bi]                                     # (Cin, H*W), lane-dense

        # im2col patch matrix via 9 lane rotations (XLU), tap order (dy, dx)
        # row-major to match the weight matrix layout.
        taps = []
        for dy in range(ksize):
            for dx in range(ksize):
                shift = dy * img_w + dx
                taps.append(xc if shift == 0
                            else pltpu.roll(xc, shift=hw - shift, axis=1))
        patches = jnp.concatenate(taps, axis=0).astype(w.dtype)  # (K*K*Cin, HW)

        # Single MXU matmul per image, bf16 inputs, fp32 accumulation.
        acc = jnp.dot(w, patches, preferred_element_type=jnp.float32)

        # Folded bias + ReLU (BN scale already inside w).
        o_ref[bi] = jnp.maximum(acc + bias, 0.0).astype(o_ref.dtype)


def _pick_batch_block(n, per_image_bytes, budget_bytes):
    """Largest divisor of n that fits the per-step VMEM budget while keeping
    at least 2 grid steps (when n >= 2) so the grid can feed both v7x cores."""
    best = 1
    for nb in range(1, n + 1):
        if n % nb:
            continue
        if nb * per_image_bytes > budget_bytes:
            break
        if n >= 2 and n // nb < 2:
            continue
        best = nb
    return best


def convolution_layer_nopad(x_nchw, w_mat, scale, bias, *, kernel_size=3,
                            compute_dtype=jnp.bfloat16,
                            vmem_budget_bytes=8 << 20):
    """x_nchw: (N, Cin, H, W). Returns (N, Cout, H-K+1, W-K+1) — PyTorch layout."""
    N, Cin, H, W = x_nchw.shape
    Cout = w_mat.shape[0]
    K = kernel_size
    Ho, Wo = H - K + 1, W - K + 1
    HW = H * W

    x_flat = x_nchw.reshape(N, Cin, HW).astype(jnp.float32)      # free reshape

    # Fold the BN (eval) scale into the weight rows; bias already carries
    # beta + scale*(conv_bias - running_mean).
    w_scaled = (w_mat.astype(jnp.float32)
                * scale.reshape(Cout, 1)).astype(compute_dtype)  # (Cout, K*K*Cin)
    bias = bias.reshape(Cout, 1).astype(jnp.float32)

    # Rough per-image VMEM cost: double-buffered in/out blocks + in-kernel
    # patches (bf16) + fp32 accumulator.
    per_image_bytes = HW * (2 * (Cin + Cout) * 4 + K * K * Cin * 2 + Cout * 4)
    NB = _pick_batch_block(N, per_image_bytes, vmem_budget_bytes)

    kernel = partial(_conv_bn_relu_kernel, img_w=W, ksize=K)

    out_flat = pl.pallas_call(
        kernel,
        out_shape=jax.ShapeDtypeStruct((N, Cout, HW), jnp.float32),
        grid_spec=pltpu.PrefetchScalarGridSpec(
            num_scalar_prefetch=0,
            grid=(N // NB,),
            in_specs=[
                pl.BlockSpec((NB, Cin, HW), lambda n: (n, 0, 0)),
                pl.BlockSpec((Cout, K * K * Cin), lambda n: (0, 0)),
                pl.BlockSpec((Cout, 1), lambda n: (0, 0)),
            ],
            out_specs=pl.BlockSpec((NB, Cout, HW), lambda n: (n, 0, 0)),
        ),
        compiler_params=pltpu.CompilerParams(
            dimension_semantics=("parallel",),        # feeds both v7x TCs
            vmem_limit_bytes=32 * 1024 * 1024,        # v5e scoped default is 16MiB
        ),
    )(x_flat, w_scaled, bias)

    # Crop the valid no-padding window (reshape is free; slice is tiny).
    return out_flat.reshape(N, Cout, H, W)[:, :, :Ho, :Wo]


def make_params(key, infilters, outfilters, kernel_size=3, eps=1e-5):
    """Deterministic init mirroring nn.Conv2d / nn.BatchNorm2d defaults."""
    Cin, Cout, K = infilters, outfilters, kernel_size
    bound = 1.0 / math.sqrt(Cin * K * K)
    k1, k2 = jax.random.split(key)

    # PyTorch conv weight layout (out, in, kh, kw) + bias
    w_oihw = jax.random.uniform(k1, (Cout, Cin, K, K), jnp.float32, -bound, bound)
    cb = jax.random.uniform(k2, (Cout,), jnp.float32, -bound, bound)

    # BatchNorm2d defaults: gamma=1, beta=0, running_mean=0, running_var=1
    gamma = jnp.ones((Cout,), jnp.float32)
    beta = jnp.zeros((Cout,), jnp.float32)
    rmean = jnp.zeros((Cout,), jnp.float32)
    rvar = jnp.ones((Cout,), jnp.float32)

    # Fold BN (eval mode) + conv bias into per-channel scale / bias.
    scale = gamma / jnp.sqrt(rvar + eps)
    bias = beta + scale * (cb - rmean)

    # Kernel-side weight matrix: w_mat[co, (dy*K+dx)*Cin + ci] = w[co, ci, dy, dx]
    w_mat = jnp.transpose(w_oihw, (0, 2, 3, 1)).reshape(Cout, K * K * Cin)

    return dict(
        w_mat=w_mat, scale=scale, bias=bias,
        # raw PyTorch-layout copies for the reference check
        w_oihw=w_oihw, cb=cb, gamma=gamma, beta=beta,
        rmean=rmean, rvar=rvar, eps=eps,
    )


def reference_forward(x_nchw, p):
    """Pure-JAX reference of ConvolutionLayerNoPad.forward (eval-mode BN)."""
    y = lax.conv_general_dilated(
        x_nchw, p["w_oihw"], window_strides=(1, 1), padding="VALID",
        dimension_numbers=("NCHW", "OIHW", "NCHW"))
    y = y + p["cb"][None, :, None, None]
    s = (p["gamma"] / jnp.sqrt(p["rvar"] + p["eps"]))[None, :, None, None]
    y = (y - p["rmean"][None, :, None, None]) * s + p["beta"][None, :, None, None]
    return jnp.maximum(y, 0.0)


if __name__ == "__main__":
    key = jax.random.PRNGKey(0)
    kx, kp, kx2 = jax.random.split(key, 3)

    Cin, Cout, H, W = 4, 8, 16, 16
    params = make_params(kp, infilters=Cin, outfilters=Cout, kernel_size=3)

    # Case 1: batch=2 -> one image per grid step, megacore-parallel grid.
    N = 2
    x = jax.random.normal(kx, (N, Cin, H, W), jnp.float32)
    out = jax.block_until_ready(
        convolution_layer_nopad(x, params["w_mat"], params["scale"],
                                params["bias"], kernel_size=3))
    ref = jax.block_until_ready(reference_forward(x, params))
    assert out.shape == (N, Cout, H - 2, W - 2), out.shape
    # bf16 MXU inputs with fp32 accumulation -> relaxed tolerance vs fp32 ref.
    assert jnp.allclose(out, ref, rtol=2e-2, atol=2e-2), \
        f"max abs err {jnp.max(jnp.abs(out - ref))}"

    # Case 2: batch=4 -> 2 images per grid step (exercises the batch-block path).
    N2 = 4
    x2 = jax.random.normal(kx2, (N2, Cin, H, W), jnp.float32)
    out2 = jax.block_until_ready(
        convolution_layer_nopad(x2, params["w_mat"], params["scale"],
                                params["bias"], kernel_size=3))
    ref2 = jax.block_until_ready(reference_forward(x2, params))
    assert out2.shape == (N2, Cout, H - 2, W - 2), out2.shape
    assert jnp.allclose(out2, ref2, rtol=2e-2, atol=2e-2), \
        f"max abs err {jnp.max(jnp.abs(out2 - ref2))}"

    print("KERNEL_OK")
</pallas_src>

<mosaic_0001>
module attributes {stable_mosaic.version = 11 : i64} {
  func.func @_conv_bn_relu_kernel(%arg0: i32, %arg1: memref<1x4x256xf32, #tpu.memory_space<vmem>>, %arg2: memref<8x36xbf16, #tpu.memory_space<vmem>>, %arg3: memref<8x1xf32, #tpu.memory_space<vmem>>, %arg4: memref<1x8x256xf32, #tpu.memory_space<vmem>>) attributes {dimension_semantics = [#tpu.dimension_semantics<parallel>], iteration_bounds = array<i64: 2>, scalar_prefetch = 0 : i64, scratch_operands = 0 : i64, tpu.core_type = #tpu.core_type<tc>, window_params = [{transform_indices = @transform_0, window_bounds = array<i64: 1, 4, 256>}, {pipeline_mode = #tpu.pipeline_mode<synchronous>, transform_indices = @transform_1, window_bounds = array<i64: 8, 36>}, {pipeline_mode = #tpu.pipeline_mode<synchronous>, transform_indices = @transform_2, window_bounds = array<i64: 8, 1>}, {transform_indices = @transform_3, window_bounds = array<i64: 1, 8, 256>}]} {
    %c0 = arith.constant 0 : index
    %c0_0 = arith.constant 0 : index
    %0 = vector.load %arg2[%c0, %c0_0] : memref<8x36xbf16, #tpu.memory_space<vmem>>, vector<8x36xbf16>
    %c0_1 = arith.constant 0 : index
    %c0_2 = arith.constant 0 : index
    %1 = vector.load %arg3[%c0_1, %c0_2] : memref<8x1xf32, #tpu.memory_space<vmem>>, vector<8x1xf32>
    %2 = vector.shape_cast %1 : vector<8x1xf32> to vector<8x1xf32>
    %3 = vector.broadcast %2 : vector<8x1xf32> to vector<8x256xf32>
    %c0_3 = arith.constant 0 : index
    %c0_4 = arith.constant 0 : index
    %c0_5 = arith.constant 0 : index
    %4 = vector.load %arg1[%c0_3, %c0_4, %c0_5] : memref<1x4x256xf32, #tpu.memory_space<vmem>>, vector<1x4x256xf32>
    %5 = vector.shape_cast %4 : vector<1x4x256xf32> to vector<4x256xf32>
    %c255_i32 = arith.constant 255 : i32
    %6 = tpu.dynamic_rotate %5 by %c255_i32 dim 1 : vector<4x256xf32>, i32 -> vector<4x256xf32>
    %c254_i32 = arith.constant 254 : i32
    %7 = tpu.dynamic_rotate %5 by %c254_i32 dim 1 : vector<4x256xf32>, i32 -> vector<4x256xf32>
    %c240_i32 = arith.constant 240 : i32
    %8 = tpu.dynamic_rotate %5 by %c240_i32 dim 1 : vector<4x256xf32>, i32 -> vector<4x256xf32>
    %c239_i32 = arith.constant 239 : i32
    %9 = tpu.dynamic_rotate %5 by %c239_i32 dim 1 : vector<4x256xf32>, i32 -> vector<4x256xf32>
    %c238_i32 = arith.constant 238 : i32
    %10 = tpu.dynamic_rotate %5 by %c238_i32 dim 1 : vector<4x256xf32>, i32 -> vector<4x256xf32>
    %c224_i32 = arith.constant 224 : i32
    %11 = tpu.dynamic_rotate %5 by %c224_i32 dim 1 : vector<4x256xf32>, i32 -> vector<4x256xf32>
    %c223_i32 = arith.constant 223 : i32
    %12 = tpu.dynamic_rotate %5 by %c223_i32 dim 1 : vector<4x256xf32>, i32 -> vector<4x256xf32>
    %c222_i32 = arith.constant 222 : i32
    %13 = tpu.dynamic_rotate %5 by %c222_i32 dim 1 : vector<4x256xf32>, i32 -> vector<4x256xf32>
    %14 = tpu.concatenate %5, %6, %7, %8, %9, %10, %11, %12, %13 in 0 : vector<4x256xf32>, vector<4x256xf32>, vector<4x256xf32>, vector<4x256xf32>, vector<4x256xf32>, vector<4x256xf32>, vector<4x256xf32>, vector<4x256xf32>, vector<4x256xf32> -> vector<36x256xf32>
    %15 = arith.truncf %14 : vector<36x256xf32> to vector<36x256xbf16>
    %cst = arith.constant dense<0.000000e+00> : vector<8x256xf32>
    %16 = tpu.matmul %0, %15, %cst {dimension_numbers = #tpu.dot_dimension_numbers<[1], [0], [0], [1], [0, 0, 1, 1], [], []>} : vector<8x36xbf16>, vector<36x256xbf16>, vector<8x256xf32> -> vector<8x256xf32>
    %17 = arith.addf %16, %3 : vector<8x256xf32>
    %cst_6 = arith.constant 0.000000e+00 : f32
    %18 = vector.broadcast %cst_6 : f32 to vector<8x256xf32>
    %19 = arith.maximumf %17, %18 : vector<8x256xf32>
    %c0_7 = arith.constant 0 : index
    %c0_8 = arith.constant 0 : index
    %c0_9 = arith.constant 0 : index
    %20 = vector.load %arg4[%c0_7, %c0_8, %c0_9] : memref<1x8x256xf32, #tpu.memory_space<vmem>>, vector<1x8x256xf32>
    %21 = vector.shape_cast %20 : vector<1x8x256xf32> to vector<8x256xf32>
    %22 = vector.shape_cast %19 : vector<8x256xf32> to vector<1x8x256xf32>
    tpu.vector_store %arg4[%c0_7, %c0_8, %c0_9], %22 {strides = array<i32>} : memref<1x8x256xf32, #tpu.memory_space<vmem>>, vector<1x8x256xf32>,
    return
  }
  func.func @transform_0(%arg0: i32) -> (i32, i32, i32) {
    %c0_i32 = arith.constant 0 : i32
    %c0_i32_0 = arith.constant 0 : i32
    %c0_i32_1 = arith.constant 0 : i32
    return %arg0, %c0_i32, %c0_i32_0 : i32, i32, i32
  }
  func.func @transform_1(%arg0: i32) -> (i32, i32) {
    %c0_i32 = arith.constant 0 : i32
    %c0_i32_0 = arith.constant 0 : i32
    %c0_i32_1 = arith.constant 0 : i32
    return %c0_i32, %c0_i32_0 : i32, i32
  }
  func.func @transform_2(%arg0: i32) -> (i32, i32) {
    %c0_i32 = arith.constant 0 : i32
    %c0_i32_0 = arith.constant 0 : i32
    %c0_i32_1 = arith.constant 0 : i32
    return %c0_i32, %c0_i32_0 : i32, i32
  }
  func.func @transform_3(%arg0: i32) -> (i32, i32, i32) {
    %c0_i32 = arith.constant 0 : i32
    %c0_i32_0 = arith.constant 0 : i32
    %c0_i32_1 = arith.constant 0 : i32
    return %arg0, %c0_i32, %c0_i32_0 : i32, i32, i32
  }
}

</mosaic_0001>

<llo_original>
// kernel: tpu_custom_call.1
$region0: #{tpu_custom_call.1}
  #allocation0 [shape = 'u32[]', space=smem, size = 0x4, offset = 0x4, fixed_abs, tag = 'smem constant byte address 0x4 - core index']
  #allocation1 [shape = 'u32[72,128]{1,0:T(1,128)}', space=vmem, size = 0x9000, scoped, tag = 'internal scratch']
  %s0 = inlined_call_operand.hbm [shape: f32[2,4,256], index: 0, kind: input, shape index: {}]
  %s1 = inlined_call_operand.vmem [shape: bf16[8,36], index: 1, kind: input, shape index: {}]
  %s2 = inlined_call_operand.vmem [shape: f32[8,1], index: 2, kind: input, shape index: {}]
  %s3 = inlined_call_operand.hbm [shape: f32[2,8,256], index: 3, kind: output, shape index: {}]
  %s4 = sld [smem:[#allocation0]]
  $region49: #{tpu_custom_call.1} parent=0
    _
  %s6 = ssub.s32 1, %s4
  %s7 = scalar_select 0, %s6, %s4
  $region1: #{tpu_custom_call.1} parent=0
    #allocation2 [shape = 'u8[8192]{0}', space=vmem, size = 0x2000, scoped, tag = 'input window, operand 0']
    #allocation3 [shape = 's32[2]{0}', space=sflag, size = 0x8, scoped, tag = 'scoped memory for tpu_custom_call.1']
    #allocation4 [shape = 's32[2]{0}', space=sflag, size = 0x8, scoped, tag = 'scoped memory for tpu_custom_call.1']
    #allocation5 [shape = 'u8[16384]{0}', space=vmem, size = 0x4000, scoped, tag = 'output window, operand 0']
    %8 = vsyncpa [#allocation3], 0
    %s9 = scalar_lea.sflag [#allocation3], 1
    %10 = vsyncpa %s9, 0
    %11 = vsyncpa [#allocation4], 0
    %s12 = scalar_lea.sflag [#allocation4], 1
    %13 = vsyncpa %s12, 0
    loop: start=0, step=1, limit=4
    $region2: #{tpu_custom_call.1} parent=1 // loop_pre_header
      _
    $region3: #{tpu_custom_call.1} parent=1 // loop_header
      %s15 = sphi 0, %s19
      %p16 = scmp.ge.s32.totalorder %s15, 4
      %s25 = sphi 0, %s27
      %s28 = sphi 0, %s25
      %s29 = sphi 0, %s28
      %s45 = sphi 0, %s29
      %s49 = sphi 0, %s49
      %s51 = sphi 0, %s49
      %s52 = sphi 0, %s51
      %s66 = sphi 0, %s52
      %s70 = sphi 0, %s70
      %s72 = sphi 0, %s70
      %s73 = sphi 0, %s72
      %s87 = sphi 0, %s73
      %s93 = sphi 0, %s95
      %s96 = sphi 0, %s93
      %s97 = sphi 0, %s96
      %s113 = sphi 0, %s97
    $region4: #{tpu_custom_call.1} parent=1 // loop_header_branch
      %18 = sbr.rel (%p16) target = $region8
    $region5: #{tpu_custom_call.1} parent=1 // loop_body
      %s20 = ssub.s32 %s15, 1
      %s21 = ssub.s32 %s15, 2
      %s22 = sadd.s32 %s15, 1
      %s23 = ssub.s32 %s15, %s22
      %p24 = scmp.eq.s32.totalorder %s23, 0
      %s26 = sadd.s32 %s25, 1
      %s27 = scalar_select %p24, %s25, %s26
      %p30 = pneg %p24
      %p31 = scmp.eq.s32.totalorder %s15, 1
      %p32 = por %p30, %p31
      %p33 = scmp.ne.s32.totalorder %s25, %s28
      %p34 = scmp.eq.s32.totalorder %s15, 0
      %p35 = por %p33, %p34
      %p36 = scmp.ne.s32.totalorder %s25, %s28
      %p37 = scmp.eq.s32.totalorder %s20, 1
      %p38 = por %p36, %p37
      %p39 = scmp.ne.s32.totalorder %s28, %s29
      %p40 = scmp.eq.s32.totalorder %s20, 0
      %p41 = por %p39, %p40
      %p42 = scmp.ne.s32.totalorder %s28, %s29
      %p43 = scmp.eq.s32.totalorder %s21, 1
      %p44 = por %p42, %p43
      %p46 = scmp.ne.s32.totalorder %s29, %s45
      %p47 = scmp.eq.s32.totalorder %s21, 0
      %p48 = por %p46, %p47
      %s50 = sadd.s32 %s49, 1
      %p53 = scmp.eq.s32.totalorder %s15, 1
      %p54 = scmp.ne.s32.totalorder %s49, %s51
      %p55 = scmp.eq.s32.totalorder %s15, 0
      %p56 = por %p54, %p55
      %p57 = scmp.ne.s32.totalorder %s49, %s51
      %p58 = scmp.eq.s32.totalorder %s20, 1
      %p59 = por %p57, %p58
      %p60 = scmp.ne.s32.totalorder %s51, %s52
      %p61 = scmp.eq.s32.totalorder %s20, 0
      %p62 = por %p60, %p61
      %p63 = scmp.ne.s32.totalorder %s51, %s52
      %p64 = scmp.eq.s32.totalorder %s21, 1
      %p65 = por %p63, %p64
      %p67 = scmp.ne.s32.totalorder %s52, %s66
      %p68 = scmp.eq.s32.totalorder %s21, 0
      %p69 = por %p67, %p68
      %s71 = sadd.s32 %s70, 1
      %p74 = scmp.eq.s32.totalorder %s15, 1
      %p75 = scmp.ne.s32.totalorder %s70, %s72
      %p76 = scmp.eq.s32.totalorder %s15, 0
      %p77 = por %p75, %p76
      %p78 = scmp.ne.s32.totalorder %s70, %s72
      %p79 = scmp.eq.s32.totalorder %s20, 1
      %p80 = por %p78, %p79
      %p81 = scmp.ne.s32.totalorder %s72, %s73
      %p82 = scmp.eq.s32.totalorder %s20, 0
      %p83 = por %p81, %p82
      %p84 = scmp.ne.s32.totalorder %s72, %s73
      %p85 = scmp.eq.s32.totalorder %s21, 1
      %p86 = por %p84, %p85
      %p88 = scmp.ne.s32.totalorder %s73, %s87
      %p89 = scmp.eq.s32.totalorder %s21, 0
      %p90 = por %p88, %p89
      %s91 = ssub.s32 %s15, %s22
      %p92 = scmp.eq.s32.totalorder %s91, 0
      %s94 = sadd.s32 %s93, 1
      %s95 = scalar_select %p92, %s93, %s94
      %p98 = pneg %p92
      %p99 = scmp.eq.s32.totalorder %s15, 1
      %p100 = por %p98, %p99
      %p101 = scmp.ne.s32.totalorder %s93, %s96
      %p102 = scmp.eq.s32.totalorder %s15, 0
      %p103 = por %p101, %p102
      %p104 = scmp.ne.s32.totalorder %s93, %s96
      %p105 = scmp.eq.s32.totalorder %s20, 1
      %p106 = por %p104, %p105
      %p107 = scmp.ne.s32.totalorder %s96, %s97
      %p108 = scmp.eq.s32.totalorder %s20, 0
      %p109 = por %p107, %p108
      %p110 = scmp.ne.s32.totalorder %s96, %s97
      %p111 = scmp.eq.s32.totalorder %s21, 1
      %p112 = por %p110, %p111
      %p114 = scmp.ne.s32.totalorder %s97, %s113
      %p115 = scmp.eq.s32.totalorder %s21, 0
      %p116 = por %p114, %p115
      %p117 = scmp.le.s32.totalorder 1, %s15
      %p118 = scmp.lt.s32.totalorder %s15, 3
      %p119 = pnand %p117, %p118
      %p120 = pneg %p119
      // Predicated region
      $region9: #{tpu_custom_call.1} parent=5 // pred_check
        _
      $region10: #{tpu_custom_call.1} parent=5 // pred_check_branch
        %122 = sbr.rel (%p119) target = $region12
      $region11: #{tpu_custom_call.1} parent=5 // pred_region
        %s123 = ssub.s32 %s15, 1
        // Predicated region
        $region13: #{tpu_custom_call.1} parent=11 // pred_check
          %p124 = pneg %p62
        $region14: #{tpu_custom_call.1} parent=11 // pred_check_branch
          %126 = sbr.rel (%p124) target = $region16
        $region15: #{tpu_custom_call.1} parent=11 // pred_region
          _
        $region16: #{tpu_custom_call.1} parent=11 // pred_fallthru
          _
        // Predicated region
        $region17: #{tpu_custom_call.1} parent=11 // pred_check
          %p127 = pneg %p83
        $region18: #{tpu_custom_call.1} parent=11 // pred_check_branch
          %129 = sbr.rel (%p127) target = $region20
        $region19: #{tpu_custom_call.1} parent=11 // pred_region
          _
        $region20: #{tpu_custom_call.1} parent=11 // pred_fallthru
          _
      $region12: #{tpu_custom_call.1} parent=5 // pred_fallthru
        _
      %p130 = scmp.lt.s32.totalorder %s15, 2
      // Predicated region
      $region21: #{tpu_custom_call.1} parent=5 // pred_check
        %p131 = pneg %p130
      $region22: #{tpu_custom_call.1} parent=5 // pred_check_branch
        %133 = sbr.rel (%p131) target = $region24
      $region23: #{tpu_custom_call.1} parent=5 // pred_region
        // Predicated region
        $region25: #{tpu_custom_call.1} parent=23 // pred_check
          %p134 = pneg %p35
        $region26: #{tpu_custom_call.1} parent=23 // pred_check_branch
          %136 = sbr.rel (%p134) target = $region28
        $region27: #{tpu_custom_call.1} parent=23 // pred_region
          %s137 = sand.u32 %s25, 1
          %s138 = scalar_lea.sflag [#allocation3], %s137
          %s139 = sand.u32 %s25, 1
          %s140 = smul.addr %s139, 8
          %s141 = scalar_lea.vmem [#allocation2], %s140
          %143 = vsyncadd %s138, 0
          %s144 = smul.addr %s15, 2
          %s145 = smul.addr %s144, 4
          %s146 = scalar_lea.hbm %s0, %s145
          %s148 = sshll.u32 %s146, 4
          %s149 = int_to_ptr.hbm [resolvable:$true] %s148
          %s150 = sshll.u32 %s141, 4
          %s151 = int_to_ptr.vmem [resolvable:$true] %s150
          %153 = dma.hbm_to_vmem [thread:$0]  %s149, 128, %s151, %s138
        $region28: #{tpu_custom_call.1} parent=23 // pred_fallthru
          _
      $region24: #{tpu_custom_call.1} parent=5 // pred_fallthru
        _
      %p154 = scmp.le.s32.totalorder 1, %s15
      %p155 = scmp.lt.s32.totalorder %s15, 3
      %p156 = pnand %p154, %p155
      %p157 = pneg %p156
      // Predicated region
      $region29: #{tpu_custom_call.1} parent=5 // pred_check
        _
      $region30: #{tpu_custom_call.1} parent=5 // pred_check_branch
        %159 = sbr.rel (%p156) target = $region32
      $region31: #{tpu_custom_call.1} parent=5 // pred_region
        %s160 = ssub.s32 %s15, 1
        %s161 = sand.u32 %s28, 1
        %s162 = scalar_lea.sflag [#allocation3], %s161
        %s163 = sand.u32 %s28, 1
        %s164 = smul.addr %s163, 8
        %s165 = scalar_lea.vmem [#allocation2], %s164
        // Predicated region
        $region33: #{tpu_custom_call.1} parent=31 // pred_check
          %p166 = pneg %p41
        $region34: #{tpu_custom_call.1} parent=31 // pred_check_branch
          %168 = sbr.rel (%p166) target = $region36
        $region35: #{tpu_custom_call.1} parent=31 // pred_region
          %170 = dma.done %s162, 128
        $region36: #{tpu_custom_call.1} parent=31 // pred_fallthru
          _
        %s171 = sand.u32 %s28, 1
        %s172 = scalar_lea.sflag [#allocation3], %s171
        %s173 = sand.u32 %s28, 1
        %s174 = smul.addr %s173, 8
        %s175 = scalar_lea.vmem [#allocation2], %s174
        %p176 = pneg %p41
        %p177 = pneg %p38
        %p178 = pneg %p62
        %p179 = pneg %p59
        %p180 = pneg %p83
        %p181 = pneg %p80
        %p182 = pneg %p109
        %p183 = pneg %p106
        %s184 = sand.u32 %s96, 1
        %s185 = scalar_lea.sflag [#allocation4], %s184
        %s186 = sand.u32 %s96, 1
        %s187 = smul.addr %s186, 16
        %s188 = scalar_lea.vmem [#allocation5], %s187
        %v190 = vld [vmem:[%s1] sm:$0xf]
        %v191 = vld [vmem:[%s2] sm:$0xff]
        %193 = vset.pattern.permute.xlu0 0
        %194 = vperm.xlu0 %193, %v191
        %v195 = vpop.permute.xlu0 %194
        %v197 = vld [vmem:[%s165] sm:$0xff]
        %199 = vst [vmem:[#allocation1] ss:$2 sm:$0xff] %v197
        %v200 = vld.sshfl [vmem:[#allocation1] sm:$0xff pattern:$0x75316420]
        %v201 = vld.sshfl [vmem:[#allocation1 + $0x8] sm:$0xff pattern:$0x75316420]
        %204 = vrot.lane.b32.xlu0 %v200, 127
        %v205 = vpop.permute.xlu0 %204
        %206 = vrot.lane.b32.xlu0 %v201, 127
        %v207 = vpop.permute.xlu0 %206
        %v208 = vlaneseq
        %v209 = vand.u32 %v208, 127
        %vm210 = vcmp.lt.s32.totalorder %v209, 127
        %v211 = vsel %vm210, %v205, %v207
        %v212 = vsel %vm210, %v207, %v205
        %213 = vst [vmem:[#allocation1] ss:$2 sm:$0xff] %v197
        %v214 = vld.sshfl [vmem:[#allocation1] sm:$0xff pattern:$0x75316420]
        %v215 = vld.sshfl [vmem:[#allocation1 + $0x8] sm:$0xff pattern:$0x75316420]
        %218 = vrot.lane.b32.xlu0 %v214, 126
        %v219 = vpop.permute.xlu0 %218
        %220 = vrot.lane.b32.xlu0 %v215, 126
        %v221 = vpop.permute.xlu0 %220
        %vm222 = vcmp.lt.s32.totalorder %v209, 126
        %v223 = vsel %vm222, %v219, %v221
        %v224 = vsel %vm222, %v221, %v219
        %225 = vst [vmem:[#allocation1] ss:$2 sm:$0xff] %v197
        %v226 = vld.sshfl [vmem:[#allocation1] sm:$0xff pattern:$0x75316420]
        %v227 = vld.sshfl [vmem:[#allocation1 + $0x8] sm:$0xff pattern:$0x75316420]
        %230 = vrot.lane.b32.xlu0 %v226, 112
        %v231 = vpop.permute.xlu0 %230
        %232 = vrot.lane.b32.xlu0 %v227, 112
        %v233 = vpop.permute.xlu0 %232
        %vm234 = vcmp.lt.s32.totalorder %v209, 112
        %v235 = vsel %vm234, %v231, %v233
        %v236 = vsel %vm234, %v233, %v231
        %237 = vst [vmem:[#allocation1] ss:$2 sm:$0xff] %v197
        %v238 = vld.sshfl [vmem:[#allocation1] sm:$0xff pattern:$0x75316420]
        %v239 = vld.sshfl [vmem:[#allocation1 + $0x8] sm:$0xff pattern:$0x75316420]
        %242 = vrot.lane.b32.xlu0 %v238, 111
        %v243 = vpop.permute.xlu0 %242
        %244 = vrot.lane.b32.xlu0 %v239, 111
        %v245 = vpop.permute.xlu0 %244
        %vm246 = vcmp.lt.s32.totalorder %v209, 111
        %v247 = vsel %vm246, %v243, %v245
        %v248 = vsel %vm246, %v245, %v243
        %249 = vst [vmem:[#allocation1] ss:$2 sm:$0xff] %v197
        %v250 = vld.sshfl [vmem:[#allocation1] sm:$0xff pattern:$0x75316420]
        %v251 = vld.sshfl [vmem:[#allocation1 + $0x8] sm:$0xff pattern:$0x75316420]
        %254 = vrot.lane.b32.xlu0 %v250, 110
        %v255 = vpop.permute.xlu0 %254
        %256 = vrot.lane.b32.xlu0 %v251, 110
        %v257 = vpop.permute.xlu0 %256
        %vm258 = vcmp.lt.s32.totalorder %v209, 110
        %v259 = vsel %vm258, %v255, %v257
        %v260 = vsel %vm258, %v257, %v255
        %261 = vst [vmem:[#allocation1] ss:$2 sm:$0xff] %v197
        %v262 = vld.sshfl [vmem:[#allocation1] sm:$0xff pattern:$0x75316420]
        %v263 = vld.sshfl [vmem:[#allocation1 + $0x8] sm:$0xff pattern:$0x75316420]
        %266 = vrot.lane.b32.xlu0 %v262, 96
        %v267 = vpop.permute.xlu0 %266
        %268 = vrot.lane.b32.xlu0 %v263, 96
        %v269 = vpop.permute.xlu0 %268
        %vm270 = vcmp.lt.s32.totalorder %v209, 96
        %v271 = vsel %vm270, %v267, %v269
        %v272 = vsel %vm270, %v269, %v267
        %273 = vst [vmem:[#allocation1] ss:$2 sm:$0xff] %v197
        %v274 = vld.sshfl [vmem:[#allocation1] sm:$0xff pattern:$0x75316420]
        %v275 = vld.sshfl [vmem:[#allocation1 + $0x8] sm:$0xff pattern:$0x75316420]
        %278 = vrot.lane.b32.xlu0 %v274, 95
        %v279 = vpop.permute.xlu0 %278
        %280 = vrot.lane.b32.xlu0 %v275, 95
        %v281 = vpop.permute.xlu0 %280
        %vm282 = vcmp.lt.s32.totalorder %v209, 95
        %v283 = vsel %vm282, %v279, %v281
        %v284 = vsel %vm282, %v281, %v279
        %285 = vst [vmem:[#allocation1] ss:$2 sm:$0xff] %v197
        %v286 = vld.sshfl [vmem:[#allocation1] sm:$0xff pattern:$0x75316420]
        %v287 = vld.sshfl [vmem:[#allocation1 + $0x8] sm:$0xff pattern:$0x75316420]
        %290 = vrot.lane.b32.xlu0 %v286, 94
        %v291 = vpop.permute.xlu0 %290
        %292 = vrot.lane.b32.xlu0 %v287, 94
        %v293 = vpop.permute.xlu0 %292
        %vm294 = vcmp.lt.s32.totalorder %v209, 94
        %v295 = vsel %vm294, %v291, %v293
        %v296 = vsel %vm294, %v293, %v291
        %297 = vst [vmem:[#allocation1] ss:$2 sm:$0xff] %v197
        %v298 = vld.sshfl [vmem:[#allocation1] sm:$0xff pattern:$0x75316420]
        %v299 = vld.sshfl [vmem:[#allocation1 + $0x8] sm:$0xff pattern:$0x75316420]
        %v304 = vrot.slane %v211, 4
        %v305 = vrot.slane %v212, 4
        %v310 = vrot.slane %v235, 4
        %v311 = vrot.slane %v236, 4
        %v316 = vrot.slane %v259, 4
        %v317 = vrot.slane %v260, 4
        %v322 = vrot.slane %v283, 4
        %v323 = vrot.slane %v284, 4
        %vm326 = vcmask 1043456
        %v327 = vsel %vm326, %v298, %v304
        %v328 = vsel %vm326, %v299, %v305
        %v329 = vsel %vm326, %v223, %v310
        %v330 = vsel %vm326, %v224, %v311
        %v331 = vsel %vm326, %v247, %v316
        %v332 = vsel %vm326, %v248, %v317
        %v333 = vsel %vm326, %v271, %v322
        %v334 = vsel %vm326, %v272, %v323
        %v335 = vpack.c.bf16 %v329, %v327
        %v336 = vpack.c.bf16 %v330, %v328
        %v337 = vpack.c.bf16 %v333, %v331
        %v338 = vpack.c.bf16 %v334, %v332
        %v339 = vpack.c.bf16 %v295, %v295
        %v340 = vpack.c.bf16 %v296, %v296
        %vm341 = vcmask 293888
        %v343 = vsel %vm341, %v190, 0
        %vm345 = vcmask 1041408
        %v347 = vsel %vm345, %v339, 0
        %v350 = vsel %vm345, %v340, 0
        %352 = vmatpush.bf16.msra.mxu0 0
        %353 = vmatpush.bf16.msra.mxu0 0
        %354 = vmatpush.bf16.msra.mxu0 0
        %355 = vmatpush.bf16.msra.mxu0 0
        %356 = vmatpush.bf16.msra.mxu0 0
        %357 = vmatpush.bf16.msra.mxu0 %v347
        %358 = vmatpush.bf16.msra.mxu0 %v337
        %359 = vmatpush.bf16.msra.mxu0 %v335
        %360 = vmatmul.bf16.gmra.mxu0 %v343
        %v361 = vpop.f32.mrf.mxu0
        %v362 = vadd.f32 %v195, %v361
        %v363 = vpop.f32.mrf.mxu0
        %364 = vdwg.mxu0
        %365 = vmatpush.bf16.msra.mxu0 0
        %366 = vmatpush.bf16.msra.mxu0 0
        %367 = vmatpush.bf16.msra.mxu0 0
        %368 = vmatpush.bf16.msra.mxu0 0
        %369 = vmatpush.bf16.msra.mxu0 0
        %370 = vmatpush.bf16.msra.mxu0 %v350
        %371 = vmatpush.bf16.msra.mxu0 %v338
        %372 = vmatpush.bf16.msra.mxu0 %v336
        %373 = vmatmul.bf16.gmra.mxu0 %v343
        %v374 = vpop.f32.mrf.mxu0
        %v375 = vadd.f32 %v195, %v374
        %v376 = vpop.f32.mrf.mxu0
        %377 = vdwg.mxu0
        %v378 = vmax.f32 %v362, 0.0
        %v379 = vmax.f32 %v375, 0.0
        %380 = vst [vmem:[%s188] sm:$0xff] %v378
        %381 = vst [vmem:[%s188 + $0x8] sm:$0xff] %v379
        %s382 = sand.u32 %s96, 1
        %s383 = scalar_lea.sflag [#allocation4], %s382
        %s384 = sand.u32 %s96, 1
        %s385 = smul.addr %s384, 16
        %s386 = scalar_lea.vmem [#allocation5], %s385
        // Predicated region
        $region37: #{tpu_custom_call.1} parent=31 // pred_check
          %p387 = pneg %p106
        $region38: #{tpu_custom_call.1} parent=31 // pred_check_branch
          %389 = sbr.rel (%p387) target = $region40
        $region39: #{tpu_custom_call.1} parent=31 // pred_region
          %391 = vsyncadd %s383, 0
          %s392 = smul.addr %s20, 2
          %s393 = smul.addr %s392, 8
          %s394 = scalar_lea.hbm %s3, %s393
          %s396 = sshll.u32 %s386, 4
          %s397 = int_to_ptr.vmem [resolvable:$true] %s396
          %s398 = sshll.u32 %s394, 4
          %s399 = int_to_ptr.hbm [resolvable:$true] %s398
          %401 = dma.vmem_to_hbm [thread:$0]  %s397, 256, %s399, %s383
        $region40: #{tpu_custom_call.1} parent=31 // pred_fallthru
          _
      $region32: #{tpu_custom_call.1} parent=5 // pred_fallthru
        _
      %p402 = scmp.le.s32.totalorder 2, %s15
      // Predicated region
      $region41: #{tpu_custom_call.1} parent=5 // pred_check
        %p403 = pneg %p402
      $region42: #{tpu_custom_call.1} parent=5 // pred_check_branch
        %405 = sbr.rel (%p403) target = $region44
      $region43: #{tpu_custom_call.1} parent=5 // pred_region
        %s406 = ssub.s32 %s15, 2
        // Predicated region
        $region45: #{tpu_custom_call.1} parent=43 // pred_check
          %p407 = pneg %p112
        $region46: #{tpu_custom_call.1} parent=43 // pred_check_branch
          %409 = sbr.rel (%p407) target = $region48
        $region47: #{tpu_custom_call.1} parent=43 // pred_region
          %s410 = sand.u32 %s97, 1
          %s411 = scalar_lea.sflag [#allocation4], %s410
          %s412 = sand.u32 %s97, 1
          %s413 = smul.addr %s412, 16
          %s414 = scalar_lea.vmem [#allocation5], %s413
          %416 = dma.done %s411, 256
        $region48: #{tpu_custom_call.1} parent=43 // pred_fallthru
          _
      $region44: #{tpu_custom_call.1} parent=5 // pred_fallthru
        _
    $region6: #{tpu_custom_call.1} parent=1 // loop_footer
      %s19 = sadd.s32 1, %s15
    $region7: #{tpu_custom_call.1} parent=1 // loop_footer_branch
      %14 = sbr.rel target = $region3
    $region8: #{tpu_custom_call.1} parent=1 // loop_exit
      _
    %417 = vsyncpa [#allocation3], 1
    %s418 = scalar_lea.sflag [#allocation3], 1
    %419 = vsyncpa %s418, 1
    %420 = vsyncpa [#allocation4], 1
    %s421 = scalar_lea.sflag [#allocation4], 1
    %422 = vsyncpa %s421, 1

</llo_original>
